<compile_context>
chip_gen: v7x
topology: tpu7x:2x2x1
jax: 0.10.0
libtpu: 0.0.40
codegen_flags: <defaults>
</compile_context>

<pallas_src>
import math
from functools import partial

import jax
import jax.numpy as jnp
from jax.experimental import pallas as pl
from jax.experimental.pallas import tpu as pltpu

_LANE = 128      # TPU lane width — keep channel dims lane-dense
_SUBLANE = 8


def _round_up(x, m):
    return (x + m - 1) // m * m


def mlp_kernel(x_ref, w1_ref, b1_ref, w2_ref, b2_ref, o_ref, *, approximate_gelu):
    # x_ref: (tm, Cin_p)   w1_ref: (Cin_p, Chid_p)  b1_ref: (1, Chid_p)  [f32]
    # w2_ref: (Chid_p, Cout_p)  b2_ref: (1, Cout_p) [f32]  o_ref: (tm, Cout_p)
    x = x_ref[...]

    # fc1 on the MXU, f32 accumulation; bias add in f32.
    h = jnp.dot(x, w1_ref[...], preferred_element_type=jnp.float32) + b1_ref[...]

    if approximate_gelu:
        # tanh approximation -> EUP slot (essentially free once MXU-bound)
        h = jax.nn.gelu(h, approximate=True)
    else:
        # exact erf GELU, same as torch.nn.GELU() default
        h = 0.5 * h * (1.0 + jax.lax.erf(h * (1.0 / math.sqrt(2.0))))

    # dropout p=0.0 is the identity — nothing to do.

    # fc2 on the MXU; only the dot input is cast down to the weight dtype.
    y = jnp.dot(h.astype(w2_ref.dtype), w2_ref[...],
                preferred_element_type=jnp.float32) + b2_ref[...]

    o_ref[...] = y.astype(o_ref.dtype)


@partial(jax.jit, static_argnames=("tm", "approximate_gelu", "compute_dtype"))
def mlp_forward(x, w1, b1, w2, b2, *, tm=256, approximate_gelu=False,
                compute_dtype=None):
    """x: (B, N, C_in) -> (B, N, C_out).

    tm: row tile (tokens per grid step). 256/512 recommended for v6e/v7x,
        128-multiples for v5e. Clamped to the (padded) token count.
    compute_dtype: optionally cast x/W1/W2 (the MXU inputs) e.g. to
        jnp.bfloat16; accumulation and elementwise math stay f32.
    """
    B, N, C_in = x.shape
    C_hid = w1.shape[1]
    C_out = w2.shape[1]
    M = B * N
    out_dtype = x.dtype

    if compute_dtype is not None:
        x = x.astype(compute_dtype)
        w1 = w1.astype(compute_dtype)
        w2 = w2.astype(compute_dtype)

    # --- lane-dense channel padding (exact: zero columns/rows) -------------
    Cin_p = _round_up(C_in, _LANE)
    Chid_p = _round_up(C_hid, _LANE)
    Cout_p = _round_up(C_out, _LANE)

    x2d = jnp.pad(x.reshape(M, C_in), ((0, 0), (0, Cin_p - C_in)))
    w1p = jnp.pad(w1, ((0, Cin_p - C_in), (0, Chid_p - C_hid)))
    w2p = jnp.pad(w2, ((0, Chid_p - C_hid), (0, Cout_p - C_out)))
    # biases stay f32: they are added to the f32 accumulator
    b1p = jnp.pad(b1.astype(jnp.float32).reshape(1, C_hid),
                  ((0, 0), (0, Chid_p - C_hid)))
    b2p = jnp.pad(b2.astype(jnp.float32).reshape(1, C_out),
                  ((0, 0), (0, Cout_p - C_out)))

    # --- row tiling with tail handling (pad M up to a tile multiple) -------
    tm_eff = min(tm, _round_up(M, _SUBLANE))
    M_pad = _round_up(M, tm_eff)
    if M_pad != M:
        x2d = jnp.pad(x2d, ((0, M_pad - M), (0, 0)))
    grid = (M_pad // tm_eff,)
    # NOTE: for realistic Swin token counts grid length >> 2, so the
    # 'parallel' axis shards cleanly across v7x's two TensorCores.

    in_itemsize = jnp.dtype(x2d.dtype).itemsize
    out_itemsize = jnp.dtype(out_dtype).itemsize

    # --- VMEM budget: double-buffered x/out tiles, single-buffered weights,
    #     plus the f32 (tm, C_hid) intermediate ----------------------------
    vmem_est = (
        2 * tm_eff * Cin_p * in_itemsize
        + 2 * tm_eff * Cout_p * out_itemsize
        + (Cin_p * Chid_p + Chid_p * Cout_p) * in_itemsize
        + (Chid_p + Cout_p) * 4
        + tm_eff * Chid_p * 4
        + tm_eff * Cout_p * 4
    )
    vmem_limit = int(min(max(int(vmem_est * 1.5), 16 * 1024 * 1024),
                         64 * 1024 * 1024))

    flops = 2 * M_pad * (Cin_p * Chid_p + Chid_p * Cout_p)
    bytes_accessed = (
        M_pad * Cin_p * in_itemsize
        + M_pad * Cout_p * out_itemsize
        + (Cin_p * Chid_p + Chid_p * Cout_p) * in_itemsize
        + (Chid_p + Cout_p) * 4
    )
    cost = pl.CostEstimate(flops=flops,
                           transcendentals=M_pad * Chid_p,
                           bytes_accessed=bytes_accessed)

    # Resident weights/biases: constant index_map -> single buffer is enough.
    resident = pl.Buffered(1)

    out2d = pl.pallas_call(
        partial(mlp_kernel, approximate_gelu=approximate_gelu),
        out_shape=jax.ShapeDtypeStruct((M_pad, Cout_p), out_dtype),
        grid_spec=pltpu.PrefetchScalarGridSpec(
            num_scalar_prefetch=0,
            grid=grid,
            in_specs=[
                pl.BlockSpec((tm_eff, Cin_p), lambda i: (i, 0)),     # x tile
                pl.BlockSpec((Cin_p, Chid_p), lambda i: (0, 0),
                             pipeline_mode=resident),                # W1
                pl.BlockSpec((1, Chid_p), lambda i: (0, 0),
                             pipeline_mode=resident),                # b1
                pl.BlockSpec((Chid_p, Cout_p), lambda i: (0, 0),
                             pipeline_mode=resident),                # W2
                pl.BlockSpec((1, Cout_p), lambda i: (0, 0),
                             pipeline_mode=resident),                # b2
            ],
            out_specs=pl.BlockSpec((tm_eff, Cout_p), lambda i: (i, 0)),
        ),
        compiler_params=pltpu.CompilerParams(
            dimension_semantics=("parallel",),
            vmem_limit_bytes=vmem_limit),
        cost_estimate=cost,
    )(x2d, w1p, b1p, w2p, b2p)

    return out2d[:M, :C_out].reshape(B, N, C_out)


def init_mlp_params(key, in_features, hidden_features, out_features,
                    dtype=jnp.float32):
    """Deterministic init mimicking nn.Linear default; weights (in, out)."""
    k1, k2, k3, k4 = jax.random.split(key, 4)
    bound1 = 1.0 / math.sqrt(in_features)
    bound2 = 1.0 / math.sqrt(hidden_features)
    w1 = jax.random.uniform(k1, (in_features, hidden_features),
                            minval=-bound1, maxval=bound1, dtype=dtype)
    b1 = jax.random.uniform(k2, (hidden_features,),
                            minval=-bound1, maxval=bound1, dtype=dtype)
    w2 = jax.random.uniform(k3, (hidden_features, out_features),
                            minval=-bound2, maxval=bound2, dtype=dtype)
    b2 = jax.random.uniform(k4, (out_features,),
                            minval=-bound2, maxval=bound2, dtype=dtype)
    return w1, b1, w2, b2


def mlp_reference(x, w1, b1, w2, b2):
    """Pure-JAX reference of the PyTorch forward (drop=0)."""
    h = x @ w1 + b1
    h = 0.5 * h * (1.0 + jax.lax.erf(h / math.sqrt(2.0)))
    return h @ w2 + b2


if __name__ == "__main__":
    key = jax.random.PRNGKey(0)
    kx, kp = jax.random.split(key)

    # Small swin-like token tensor: batch=2, 64 tokens, in_features=32
    B, N, C_in = 2, 64, 32
    C_hid, C_out = 128, 32  # mlp_ratio=4

    x = jax.random.normal(kx, (B, N, C_in), dtype=jnp.float32)
    w1, b1, w2, b2 = init_mlp_params(kp, C_in, C_hid, C_out)

    out = mlp_forward(x, w1, b1, w2, b2)
    out = jax.block_until_ready(out)

    ref = mlp_reference(x, w1, b1, w2, b2)
    assert out.shape == (B, N, C_out), out.shape
    assert jnp.allclose(out, ref, atol=1e-5, rtol=1e-5), \
        float(jnp.max(jnp.abs(out - ref)))

    print("KERNEL_OK")
</pallas_src>

<mosaic_0001>
module attributes {stable_mosaic.version = 11 : i64} {
  func.func @mlp_kernel(%arg0: i32, %arg1: memref<128x128xf32, #tpu.memory_space<vmem>>, %arg2: memref<128x128xf32, #tpu.memory_space<vmem>>, %arg3: memref<1x128xf32, #tpu.memory_space<vmem>>, %arg4: memref<128x128xf32, #tpu.memory_space<vmem>>, %arg5: memref<1x128xf32, #tpu.memory_space<vmem>>, %arg6: memref<128x128xf32, #tpu.memory_space<vmem>>) attributes {dimension_semantics = [#tpu.dimension_semantics<parallel>], iteration_bounds = array<i64: 1>, scalar_prefetch = 0 : i64, scratch_operands = 0 : i64, tpu.core_type = #tpu.core_type<tc>, window_params = [{transform_indices = @transform_0, window_bounds = array<i64: 128, 128>}, {pipeline_mode = #tpu.pipeline_mode<synchronous>, transform_indices = @transform_1, window_bounds = array<i64: 128, 128>}, {pipeline_mode = #tpu.pipeline_mode<synchronous>, transform_indices = @transform_2, window_bounds = array<i64: 1, 128>}, {pipeline_mode = #tpu.pipeline_mode<synchronous>, transform_indices = @transform_3, window_bounds = array<i64: 128, 128>}, {pipeline_mode = #tpu.pipeline_mode<synchronous>, transform_indices = @transform_4, window_bounds = array<i64: 1, 128>}, {transform_indices = @transform_5, window_bounds = array<i64: 128, 128>}]} {
    %c0 = arith.constant 0 : index
    %c0_0 = arith.constant 0 : index
    %0 = vector.load %arg1[%c0, %c0_0] : memref<128x128xf32, #tpu.memory_space<vmem>>, vector<128x128xf32>
    %c0_1 = arith.constant 0 : index
    %c0_2 = arith.constant 0 : index
    %1 = vector.load %arg2[%c0_1, %c0_2] : memref<128x128xf32, #tpu.memory_space<vmem>>, vector<128x128xf32>
    %cst = arith.constant dense<0.000000e+00> : vector<128x128xf32>
    %2 = tpu.matmul %0, %1, %cst {dimension_numbers = #tpu.dot_dimension_numbers<[1], [0], [0], [1], [0, 0, 1, 1], [], []>} : vector<128x128xf32>, vector<128x128xf32>, vector<128x128xf32> -> vector<128x128xf32>
    %c0_3 = arith.constant 0 : index
    %c0_4 = arith.constant 0 : index
    %3 = vector.load %arg3[%c0_3, %c0_4] : memref<1x128xf32, #tpu.memory_space<vmem>>, vector<1x128xf32>
    %4 = vector.broadcast %3 : vector<1x128xf32> to vector<128x128xf32>
    %5 = arith.addf %2, %4 : vector<128x128xf32>
    %cst_5 = arith.constant 5.000000e-01 : f32
    %6 = vector.broadcast %cst_5 : f32 to vector<128x128xf32>
    %7 = arith.mulf %6, %5 : vector<128x128xf32>
    %cst_6 = arith.constant 0.707106769 : f32
    %8 = vector.broadcast %cst_6 : f32 to vector<128x128xf32>
    %9 = arith.mulf %5, %8 : vector<128x128xf32>
    %10 = math.erf %9 : vector<128x128xf32>
    %cst_7 = arith.constant 1.000000e+00 : f32
    %11 = vector.broadcast %cst_7 : f32 to vector<128x128xf32>
    %12 = arith.addf %11, %10 : vector<128x128xf32>
    %13 = arith.mulf %7, %12 : vector<128x128xf32>
    %c0_8 = arith.constant 0 : index
    %c0_9 = arith.constant 0 : index
    %14 = vector.load %arg4[%c0_8, %c0_9] : memref<128x128xf32, #tpu.memory_space<vmem>>, vector<128x128xf32>
    %cst_10 = arith.constant dense<0.000000e+00> : vector<128x128xf32>
    %15 = tpu.matmul %13, %14, %cst_10 {dimension_numbers = #tpu.dot_dimension_numbers<[1], [0], [0], [1], [0, 0, 1, 1], [], []>} : vector<128x128xf32>, vector<128x128xf32>, vector<128x128xf32> -> vector<128x128xf32>
    %c0_11 = arith.constant 0 : index
    %c0_12 = arith.constant 0 : index
    %16 = vector.load %arg5[%c0_11, %c0_12] : memref<1x128xf32, #tpu.memory_space<vmem>>, vector<1x128xf32>
    %17 = vector.broadcast %16 : vector<1x128xf32> to vector<128x128xf32>
    %18 = arith.addf %15, %17 : vector<128x128xf32>
    %c0_13 = arith.constant 0 : index
    %c0_14 = arith.constant 0 : index
    %19 = vector.load %arg6[%c0_13, %c0_14] : memref<128x128xf32, #tpu.memory_space<vmem>>, vector<128x128xf32>
    tpu.vector_store %arg6[%c0_13, %c0_14], %18 {strides = array<i32>} : memref<128x128xf32, #tpu.memory_space<vmem>>, vector<128x128xf32>,
    return
  }
  func.func @transform_0(%arg0: i32) -> (i32, i32) {
    %c0_i32 = arith.constant 0 : i32
    %c0_i32_0 = arith.constant 0 : i32
    return %arg0, %c0_i32 : i32, i32
  }
  func.func @transform_1(%arg0: i32) -> (i32, i32) {
    %c0_i32 = arith.constant 0 : i32
    %c0_i32_0 = arith.constant 0 : i32
    %c0_i32_1 = arith.constant 0 : i32
    return %c0_i32, %c0_i32_0 : i32, i32
  }
  func.func @transform_2(%arg0: i32) -> (i32, i32) {
    %c0_i32 = arith.constant 0 : i32
    %c0_i32_0 = arith.constant 0 : i32
    %c0_i32_1 = arith.constant 0 : i32
    return %c0_i32, %c0_i32_0 : i32, i32
  }
  func.func @transform_3(%arg0: i32) -> (i32, i32) {
    %c0_i32 = arith.constant 0 : i32
    %c0_i32_0 = arith.constant 0 : i32
    %c0_i32_1 = arith.constant 0 : i32
    return %c0_i32, %c0_i32_0 : i32, i32
  }
  func.func @transform_4(%arg0: i32) -> (i32, i32) {
    %c0_i32 = arith.constant 0 : i32
    %c0_i32_0 = arith.constant 0 : i32
    %c0_i32_1 = arith.constant 0 : i32
    return %c0_i32, %c0_i32_0 : i32, i32
  }
  func.func @transform_5(%arg0: i32) -> (i32, i32) {
    %c0_i32 = arith.constant 0 : i32
    %c0_i32_0 = arith.constant 0 : i32
    return %arg0, %c0_i32 : i32, i32
  }
}

</mosaic_0001>

<llo_original>
// kernel: mlp_forward.1
$region0: #{mlp_forward.1}
  #allocation0 [shape = 'u32[]', space=smem, size = 0x4, offset = 0x4, fixed_abs, tag = 'smem constant byte address 0x4 - core index']
  #allocation1 [shape = 'u32[144,128]{1,0:T(1,128)}', space=vmem, size = 0x12000, scoped, tag = 'internal scratch']
  %s0 = inlined_call_operand.vmem [shape: f32[128,128], index: 0, kind: input, shape index: {}]
  %s1 = inlined_call_operand.vmem [shape: f32[128,128], index: 1, kind: input, shape index: {}]
  %s2 = inlined_call_operand.vmem [shape: f32[1,128], index: 2, kind: input, shape index: {}]
  %s3 = inlined_call_operand.vmem [shape: f32[128,128], index: 3, kind: input, shape index: {}]
  %s4 = inlined_call_operand.vmem [shape: f32[1,128], index: 4, kind: input, shape index: {}]
  %s5 = inlined_call_operand.vmem [shape: f32[128,128], index: 5, kind: output, shape index: {}]
  %s6 = sld [smem:[#allocation0]]
  $region30: #{mlp_forward.1} parent=0
    _
  %s8 = ssub.s32 1, %s6
  %s9 = scalar_select 0, %s8, %s6
  // Predicated region
  $region2: #{mlp_forward.1} parent=0 // pred_check
    _
  $region3: #{mlp_forward.1} parent=0 // pred_check_branch
    %11 = sbr.rel (0) target = $region5
  $region4: #{mlp_forward.1} parent=0 // pred_region
    _
  $region5: #{mlp_forward.1} parent=0 // pred_fallthru
    _
  // Predicated region
  $region6: #{mlp_forward.1} parent=0 // pred_check
    _
  $region7: #{mlp_forward.1} parent=0 // pred_check_branch
    %13 = sbr.rel (0) target = $region9
  $region8: #{mlp_forward.1} parent=0 // pred_region
    _
  $region9: #{mlp_forward.1} parent=0 // pred_fallthru
    _
  // Predicated region
  $region10: #{mlp_forward.1} parent=0 // pred_check
    _
  $region11: #{mlp_forward.1} parent=0 // pred_check_branch
    %15 = sbr.rel (0) target = $region13
  $region12: #{mlp_forward.1} parent=0 // pred_region
    _
  $region13: #{mlp_forward.1} parent=0 // pred_fallthru
    _
  // Predicated region
  $region14: #{mlp_forward.1} parent=0 // pred_check
    _
  $region15: #{mlp_forward.1} parent=0 // pred_check_branch
    %17 = sbr.rel (0) target = $region17
  $region16: #{mlp_forward.1} parent=0 // pred_region
    _
  $region17: #{mlp_forward.1} parent=0 // pred_fallthru
    _
  // Predicated region
  $region18: #{mlp_forward.1} parent=0 // pred_check
    _
  $region19: #{mlp_forward.1} parent=0 // pred_check_branch
    %19 = sbr.rel (0) target = $region21
  $region20: #{mlp_forward.1} parent=0 // pred_region
    _
  $region21: #{mlp_forward.1} parent=0 // pred_fallthru
    _
  %v20 = vld [vmem:[%s0] sm:$0xff]
  %v21 = vld [vmem:[%s0 + $0x8] sm:$0xff]
  %v22 = vld [vmem:[%s0 + $0x10] sm:$0xff]
  %v23 = vld [vmem:[%s0 + $0x18] sm:$0xff]
  %v24 = vld [vmem:[%s0 + $0x20] sm:$0xff]
  %v25 = vld [vmem:[%s0 + $0x28] sm:$0xff]
  %v26 = vld [vmem:[%s0 + $0x30] sm:$0xff]
  %v27 = vld [vmem:[%s0 + $0x38] sm:$0xff]
  %v28 = vld [vmem:[%s0 + $0x40] sm:$0xff]
  %v29 = vld [vmem:[%s0 + $0x48] sm:$0xff]
  %v30 = vld [vmem:[%s0 + $0x50] sm:$0xff]
  %v31 = vld [vmem:[%s0 + $0x58] sm:$0xff]
  %v32 = vld [vmem:[%s0 + $0x60] sm:$0xff]
  %v33 = vld [vmem:[%s0 + $0x68] sm:$0xff]
  %v34 = vld [vmem:[%s0 + $0x70] sm:$0xff]
  %v35 = vld [vmem:[%s0 + $0x78] sm:$0xff]
  %v36 = vld [vmem:[%s1] sm:$0xff]
  %v37 = vld [vmem:[%s1 + $0x8] sm:$0xff]
  %v38 = vld [vmem:[%s1 + $0x10] sm:$0xff]
  %v39 = vld [vmem:[%s1 + $0x18] sm:$0xff]
  %v40 = vld [vmem:[%s1 + $0x20] sm:$0xff]
  %v41 = vld [vmem:[%s1 + $0x28] sm:$0xff]
  %v42 = vld [vmem:[%s1 + $0x30] sm:$0xff]
  %v43 = vld [vmem:[%s1 + $0x38] sm:$0xff]
  %v44 = vld [vmem:[%s1 + $0x40] sm:$0xff]
  %v45 = vld [vmem:[%s1 + $0x48] sm:$0xff]
  %v46 = vld [vmem:[%s1 + $0x50] sm:$0xff]
  %v47 = vld [vmem:[%s1 + $0x58] sm:$0xff]
  %v48 = vld [vmem:[%s1 + $0x60] sm:$0xff]
  %v49 = vld [vmem:[%s1 + $0x68] sm:$0xff]
  %v50 = vld [vmem:[%s1 + $0x70] sm:$0xff]
  %v51 = vld [vmem:[%s1 + $0x78] sm:$0xff]
  %v52 = vld [vmem:[%s2] sm:$0x1]
  %v54 = vlaneseq
  %v55 = vshrl.u32 %v54, 7
  %v56 = vsub.s32 0, %v55
  %v57 = vrot.slane %v52, %v56
  %59 = vmatprep.subr.mxu0 0.0
  %60 = vmatpush1.msra.mxu0 %v36
  %61 = vmatprep.subr.mxu0 0.0
  %62 = vmatpush1.msra.mxu0 %v37
  %63 = vmatprep.subr.mxu0 0.0
  %64 = vmatpush1.msra.mxu0 %v38
  %65 = vmatprep.subr.mxu0 0.0
  %66 = vmatpush1.msra.mxu0 %v39
  %67 = vmatprep.subr.mxu0 0.0
  %68 = vmatpush1.msra.mxu0 %v40
  %69 = vmatprep.subr.mxu0 0.0
  %70 = vmatpush1.msra.mxu0 %v41
  %71 = vmatprep.subr.mxu0 0.0
  %72 = vmatpush1.msra.mxu0 %v42
  %73 = vmatprep.subr.mxu0 0.0
  %74 = vmatpush1.msra.mxu0 %v43
  %75 = vmatprep.subr.mxu0 0.0
  %76 = vmatpush1.msra.mxu0 %v44
  %77 = vmatprep.subr.mxu0 0.0
  %78 = vmatpush1.msra.mxu0 %v45
  %79 = vmatprep.subr.mxu0 0.0
  %80 = vmatpush1.msra.mxu0 %v46
  %81 = vmatprep.subr.mxu0 0.0
  %82 = vmatpush1.msra.mxu0 %v47
  %83 = vmatprep.subr.mxu0 0.0
  %84 = vmatpush1.msra.mxu0 %v48
  %85 = vmatprep.subr.mxu0 0.0
  %86 = vmatpush1.msra.mxu0 %v49
  %87 = vmatprep.subr.mxu0 0.0
  %88 = vmatpush1.msra.mxu0 %v50
  %89 = vmatprep.subr.mxu0 0.0
  %90 = vmatpush1.msra.mxu0 %v51
  %91 = vmatprep.subr.mxu0 0.0
  %92 = vmatpush1.msra.mxu0 0.0
  %93 = vmatprep.subr.mxu0 0.0
  %94 = vmatpush1.msra.mxu0 0.0
  %95 = vmatprep.subr.mxu0 0.0
  %96 = vmatpush1.msra.mxu0 0.0
  %97 = vmatprep.subr.mxu0 0.0
  %98 = vmatpush1.msra.mxu0 0.0
  %99 = vmatprep.subr.mxu0 0.0
  %100 = vmatpush1.msra.mxu0 0.0
  %101 = vmatprep.subr.mxu0 0.0
  %102 = vmatpush1.msra.mxu0 0.0
  %103 = vmatprep.subr.mxu0 0.0
  %104 = vmatpush1.msra.mxu0 0.0
  %105 = vmatprep.subr.mxu0 0.0
  %106 = vmatpush1.msra.mxu0 0.0
  %107 = vmatprep.subr.mxu0 0.0
  %108 = vmatpush1.msra.mxu0 0.0
  %109 = vmatprep.subr.mxu0 0.0
  %110 = vmatpush1.msra.mxu0 0.0
  %111 = vmatprep.subr.mxu0 0.0
  %112 = vmatpush1.msra.mxu0 0.0
  %113 = vmatprep.subr.mxu0 0.0
  %114 = vmatpush1.msra.mxu0 0.0
  %115 = vmatprep.subr.mxu0 0.0
  %116 = vmatpush1.msra.mxu0 0.0
  %117 = vmatprep.subr.mxu0 0.0
  %118 = vmatpush1.msra.mxu0 0.0
  %119 = vmatprep.subr.mxu0 0.0
  %120 = vmatpush1.msra.mxu0 0.0
  %121 = vmatprep.subr.mxu0 0.0
  %122 = vmatpush1.msra.mxu0 0.0
  %123 = vmatprep.mubr.f32.mxu0 0.0
  %124 = vmatmul.mubr.f32.gmra.mrb[0].mxu0 %v20
  %v125 = vpop.f32.mrb[0].mxu0
  %v126 = vadd.f32 %v57, %v125
  %v127 = vpop.f32.mrb[0].mxu0
  %128 = vmatprep.mubr.f32.mxu0 0.0
  %129 = vmatmul.mubr.f32.gmra.mrb[0].mxu0 %v21
  %v130 = vpop.f32.mrb[0].mxu0
  %v131 = vadd.f32 %v57, %v130
  %v132 = vpop.f32.mrb[0].mxu0
  %133 = vmatprep.mubr.f32.mxu0 0.0
  %134 = vmatmul.mubr.f32.gmra.mrb[0].mxu0 %v22
  %v135 = vpop.f32.mrb[0].mxu0
  %v136 = vadd.f32 %v57, %v135
  %v137 = vpop.f32.mrb[0].mxu0
  %138 = vmatprep.mubr.f32.mxu0 0.0
  %139 = vmatmul.mubr.f32.gmra.mrb[0].mxu0 %v23
  %v140 = vpop.f32.mrb[0].mxu0
  %v141 = vadd.f32 %v57, %v140
  %v142 = vpop.f32.mrb[0].mxu0
  %143 = vmatprep.mubr.f32.mxu0 0.0
  %144 = vmatmul.mubr.f32.gmra.mrb[0].mxu0 %v24
  %v145 = vpop.f32.mrb[0].mxu0
  %v146 = vadd.f32 %v57, %v145
  %v147 = vpop.f32.mrb[0].mxu0
  %148 = vmatprep.mubr.f32.mxu0 0.0
  %149 = vmatmul.mubr.f32.gmra.mrb[0].mxu0 %v25
  %v150 = vpop.f32.mrb[0].mxu0
  %v151 = vadd.f32 %v57, %v150
  %v152 = vpop.f32.mrb[0].mxu0
  %153 = vmatprep.mubr.f32.mxu0 0.0
  %154 = vmatmul.mubr.f32.gmra.mrb[0].mxu0 %v26
  %v155 = vpop.f32.mrb[0].mxu0
  %v156 = vadd.f32 %v57, %v155
  %v157 = vpop.f32.mrb[0].mxu0
  %158 = vmatprep.mubr.f32.mxu0 0.0
  %159 = vmatmul.mubr.f32.gmra.mrb[0].mxu0 %v27
  %v160 = vpop.f32.mrb[0].mxu0
  %v161 = vadd.f32 %v57, %v160
  %v162 = vpop.f32.mrb[0].mxu0
  %163 = vmatprep.mubr.f32.mxu0 0.0
  %164 = vmatmul.mubr.f32.gmra.mrb[0].mxu0 %v28
  %v165 = vpop.f32.mrb[0].mxu0
  %v166 = vadd.f32 %v57, %v165
  %v167 = vpop.f32.mrb[0].mxu0
  %168 = vmatprep.mubr.f32.mxu0 0.0
  %169 = vmatmul.mubr.f32.gmra.mrb[0].mxu0 %v29
  %v170 = vpop.f32.mrb[0].mxu0
  %v171 = vadd.f32 %v57, %v170
  %v172 = vpop.f32.mrb[0].mxu0
  %173 = vmatprep.mubr.f32.mxu0 0.0
  %174 = vmatmul.mubr.f32.gmra.mrb[0].mxu0 %v30
  %v175 = vpop.f32.mrb[0].mxu0
  %v176 = vadd.f32 %v57, %v175
  %v177 = vpop.f32.mrb[0].mxu0
  %178 = vmatprep.mubr.f32.mxu0 0.0
  %179 = vmatmul.mubr.f32.gmra.mrb[0].mxu0 %v31
  %v180 = vpop.f32.mrb[0].mxu0
  %v181 = vadd.f32 %v57, %v180
  %v182 = vpop.f32.mrb[0].mxu0
  %183 = vmatprep.mubr.f32.mxu0 0.0
  %184 = vmatmul.mubr.f32.gmra.mrb[0].mxu0 %v32
  %v185 = vpop.f32.mrb[0].mxu0
  %v186 = vadd.f32 %v57, %v185
  %v187 = vpop.f32.mrb[0].mxu0
  %188 = vmatprep.mubr.f32.mxu0 0.0
  %189 = vmatmul.mubr.f32.gmra.mrb[0].mxu0 %v33
  %v190 = vpop.f32.mrb[0].mxu0
  %v191 = vadd.f32 %v57, %v190
  %v192 = vpop.f32.mrb[0].mxu0
  %193 = vmatprep.mubr.f32.mxu0 0.0
  %194 = vmatmul.mubr.f32.gmra.mrb[0].mxu0 %v34
  %v195 = vpop.f32.mrb[0].mxu0
  %v196 = vadd.f32 %v57, %v195
  %v197 = vpop.f32.mrb[0].mxu0
  %198 = vmatprep.mubr.f32.mxu0 0.0
  %199 = vmatmul.mubr.f32.gmra.mrb[0].mxu0 %v35
  %v200 = vpop.f32.mrb[0].mxu0
  %v201 = vadd.f32 %v57, %v200
  %v202 = vpop.f32.mrb[0].mxu0
  %203 = vdwg.mxu0
  %v204 = vmul.f32 %v126, 0.5
  %v205 = vmul.f32 %v131, 0.5
  %v206 = vmul.f32 %v136, 0.5
  %v207 = vmul.f32 %v141, 0.5
  %v208 = vmul.f32 %v146, 0.5
  %v209 = vmul.f32 %v151, 0.5
  %v210 = vmul.f32 %v156, 0.5
  %v211 = vmul.f32 %v161, 0.5
  %v212 = vmul.f32 %v166, 0.5
  %v213 = vmul.f32 %v171, 0.5
  %v214 = vmul.f32 %v176, 0.5
  %v215 = vmul.f32 %v181, 0.5
  %v216 = vmul.f32 %v186, 0.5
  %v217 = vmul.f32 %v191, 0.5
  %v218 = vmul.f32 %v196, 0.5
  %v219 = vmul.f32 %v201, 0.5
  %v220 = vmul.f32 %v126, 0.70710677
  %v221 = vmul.f32 %v131, 0.70710677
  %v222 = vmul.f32 %v136, 0.70710677
  %v223 = vmul.f32 %v141, 0.70710677
  %v224 = vmul.f32 %v146, 0.70710677
  %v225 = vmul.f32 %v151, 0.70710677
  %v226 = vmul.f32 %v156, 0.70710677
  %v227 = vmul.f32 %v161, 0.70710677
  %v228 = vmul.f32 %v166, 0.70710677
  %v229 = vmul.f32 %v171, 0.70710677
  %v230 = vmul.f32 %v176, 0.70710677
  %v231 = vmul.f32 %v181, 0.70710677
  %v232 = vmul.f32 %v186, 0.70710677
  %v233 = vmul.f32 %v191, 0.70710677
  %v234 = vmul.f32 %v196, 0.70710677
  %v235 = vmul.f32 %v201, 0.70710677
  %v236 = verf.f32.pop %v220
  %v237 = verf.f32.pop %v221
  %v238 = verf.f32.pop %v222
  %v239 = verf.f32.pop %v223
  %v240 = verf.f32.pop %v224
  %v241 = verf.f32.pop %v225
  %v242 = verf.f32.pop %v226
  %v243 = verf.f32.pop %v227
  %v244 = verf.f32.pop %v228
  %v245 = verf.f32.pop %v229
  %v246 = verf.f32.pop %v230
  %v247 = verf.f32.pop %v231
  %v248 = verf.f32.pop %v232
  %v249 = verf.f32.pop %v233
  %v250 = verf.f32.pop %v234
  %v251 = verf.f32.pop %v235
  %v252 = vadd.f32 %v236, 1.0
  %v253 = vadd.f32 %v237, 1.0
  %v254 = vadd.f32 %v238, 1.0
  %v255 = vadd.f32 %v239, 1.0
  %v256 = vadd.f32 %v240, 1.0
  %v257 = vadd.f32 %v241, 1.0
  %v258 = vadd.f32 %v242, 1.0
  %v259 = vadd.f32 %v243, 1.0
  %v260 = vadd.f32 %v244, 1.0
  %v261 = vadd.f32 %v245, 1.0
  %v262 = vadd.f32 %v246, 1.0
  %v263 = vadd.f32 %v247, 1.0
  %v264 = vadd.f32 %v248, 1.0
  %v265 = vadd.f32 %v249, 1.0
  %v266 = vadd.f32 %v250, 1.0
  %v267 = vadd.f32 %v251, 1.0
  %v268 = vmul.f32 %v204, %v252
  %v269 = vmul.f32 %v205, %v253
  %v270 = vmul.f32 %v206, %v254
  %v271 = vmul.f32 %v207, %v255
  %v272 = vmul.f32 %v208, %v256
  %v273 = vmul.f32 %v209, %v257
  %v274 = vmul.f32 %v210, %v258
  %v275 = vmul.f32 %v211, %v259
  %v276 = vmul.f32 %v212, %v260
  %v277 = vmul.f32 %v213, %v261
  %v278 = vmul.f32 %v214, %v262
  %v279 = vmul.f32 %v215, %v263
  %v280 = vmul.f32 %v216, %v264
  %v281 = vmul.f32 %v217, %v265
  %v282 = vmul.f32 %v218, %v266
  %v283 = vmul.f32 %v219, %v267
  %v284 = vld [vmem:[%s3] sm:$0xff]
  %v285 = vld [vmem:[%s3 + $0x8] sm:$0xff]
  %v286 = vld [vmem:[%s3 + $0x10] sm:$0xff]
  %v287 = vld [vmem:[%s3 + $0x18] sm:$0xff]
  %v288 = vld [vmem:[%s3 + $0x20] sm:$0xff]
  %v289 = vld [vmem:[%s3 + $0x28] sm:$0xff]
  %v290 = vld [vmem:[%s3 + $0x30] sm:$0xff]
  %v291 = vld [vmem:[%s3 + $0x38] sm:$0xff]
  %v292 = vld [vmem:[%s3 + $0x40] sm:$0xff]
  %v293 = vld [vmem:[%s3 + $0x48] sm:$0xff]
  %v294 = vld [vmem:[%s3 + $0x50] sm:$0xff]
  %v295 = vld [vmem:[%s3 + $0x58] sm:$0xff]
  %v296 = vld [vmem:[%s3 + $0x60] sm:$0xff]
  %v297 = vld [vmem:[%s3 + $0x68] sm:$0xff]
  %v298 = vld [vmem:[%s3 + $0x70] sm:$0xff]
  %v299 = vld [vmem:[%s3 + $0x78] sm:$0xff]
  %v300 = vld [vmem:[%s4] sm:$0x1]
  %v302 = vlaneseq
  %v303 = vshrl.u32 %v302, 7
  %v304 = vsub.s32 0, %v303
  %v305 = vrot.slane %v300, %v304
  %307 = vmatprep.subr.mxu0 0.0
  %308 = vmatpush1.msra.mxu0 %v284
  %309 = vmatprep.subr.mxu0 0.0
  %310 = vmatpush1.msra.mxu0 %v285
  %311 = vmatprep.subr.mxu0 0.0
  %312 = vmatpush1.msra.mxu0 %v286
  %313 = vmatprep.subr.mxu0 0.0
  %314 = vmatpush1.msra.mxu0 %v287
  %315 = vmatprep.subr.mxu0 0.0
  %316 = vmatpush1.msra.mxu0 %v288
  %317 = vmatprep.subr.mxu0 0.0
  %318 = vmatpush1.msra.mxu0 %v289
  %319 = vmatprep.subr.mxu0 0.0
  %320 = vmatpush1.msra.mxu0 %v290
  %321 = vmatprep.subr.mxu0 0.0
  %322 = vmatpush1.msra.mxu0 %v291
  %323 = vmatprep.subr.mxu0 0.0
  %324 = vmatpush1.msra.mxu0 %v292
  %325 = vmatprep.subr.mxu0 0.0
  %326 = vmatpush1.msra.mxu0 %v293
  %327 = vmatprep.subr.mxu0 0.0
  %328 = vmatpush1.msra.mxu0 %v294
  %329 = vmatprep.subr.mxu0 0.0
  %330 = vmatpush1.msra.mxu0 %v295
  %331 = vmatprep.subr.mxu0 0.0
  %332 = vmatpush1.msra.mxu0 %v296
  %333 = vmatprep.subr.mxu0 0.0
  %334 = vmatpush1.msra.mxu0 %v297
  %335 = vmatprep.subr.mxu0 0.0
  %336 = vmatpush1.msra.mxu0 %v298
  %337 = vmatprep.subr.mxu0 0.0
  %338 = vmatpush1.msra.mxu0 %v299
  %339 = vmatprep.subr.mxu0 0.0
  %340 = vmatpush1.msra.mxu0 0.0
  %341 = vmatprep.subr.mxu0 0.0
  %342 = vmatpush1.msra.mxu0 0.0
  %343 = vmatprep.subr.mxu0 0.0
  %344 = vmatpush1.msra.mxu0 0.0
  %345 = vmatprep.subr.mxu0 0.0
  %346 = vmatpush1.msra.mxu0 0.0
  %347 = vmatprep.subr.mxu0 0.0
  %348 = vmatpush1.msra.mxu0 0.0
  %349 = vmatprep.subr.mxu0 0.0
  %350 = vmatpush1.msra.mxu0 0.0
  %351 = vmatprep.subr.mxu0 0.0
  %352 = vmatpush1.msra.mxu0 0.0
  %353 = vmatprep.subr.mxu0 0.0
  %354 = vmatpush1.msra.mxu0 0.0
  %355 = vmatprep.subr.mxu0 0.0
  %356 = vmatpush1.msra.mxu0 0.0
  %357 = vmatprep.subr.mxu0 0.0
  %358 = vmatpush1.msra.mxu0 0.0
  %359 = vmatprep.subr.mxu0 0.0
  %360 = vmatpush1.msra.mxu0 0.0
  %361 = vmatprep.subr.mxu0 0.0
  %362 = vmatpush1.msra.mxu0 0.0
  %363 = vmatprep.subr.mxu0 0.0
  %364 = vmatpush1.msra.mxu0 0.0
  %365 = vmatprep.subr.mxu0 0.0
  %366 = vmatpush1.msra.mxu0 0.0
  %367 = vmatprep.subr.mxu0 0.0
  %368 = vmatpush1.msra.mxu0 0.0
  %369 = vmatprep.subr.mxu0 0.0
  %370 = vmatpush1.msra.mxu0 0.0
  %371 = vmatprep.mubr.f32.mxu0 0.0
  %372 = vmatmul.mubr.f32.gmra.mrb[0].mxu0 %v268
  %v373 = vpop.f32.mrb[0].mxu0
  %v374 = vadd.f32 %v305, %v373
  %v375 = vpop.f32.mrb[0].mxu0
  %376 = vmatprep.mubr.f32.mxu0 0.0
  %377 = vmatmul.mubr.f32.gmra.mrb[0].mxu0 %v269
  %v378 = vpop.f32.mrb[0].mxu0
  %v379 = vadd.f32 %v305, %v378
  %v380 = vpop.f32.mrb[0].mxu0
  %381 = vmatprep.mubr.f32.mxu0 0.0
  %382 = vmatmul.mubr.f32.gmra.mrb[0].mxu0 %v270
  %v383 = vpop.f32.mrb[0].mxu0
  %v384 = vadd.f32 %v305, %v383
  %v385 = vpop.f32.mrb[0].mxu0
  %386 = vmatprep.mubr.f32.mxu0 0.0
  %387 = vmatmul.mubr.f32.gmra.mrb[0].mxu0 %v271
  %v388 = vpop.f32.mrb[0].mxu0
  %v389 = vadd.f32 %v305, %v388
  %v390 = vpop.f32.mrb[0].mxu0
  %391 = vmatprep.mubr.f32.mxu0 0.0
  %392 = vmatmul.mubr.f32.gmra.mrb[0].mxu0 %v272
  %v393 = vpop.f32.mrb[0].mxu0
  %v394 = vadd.f32 %v305, %v393
  %v395 = vpop.f32.mrb[0].mxu0
  %396 = vmatprep.mubr.f32.mxu0 0.0
  %397 = vmatmul.mubr.f32.gmra.mrb[0].mxu0 %v273
  %v398 = vpop.f32.mrb[0].mxu0
  %v399 = vadd.f32 %v305, %v398
  %v400 = vpop.f32.mrb[0].mxu0
  %401 = vmatprep.mubr.f32.mxu0 0.0
  %402 = vmatmul.mubr.f32.gmra.mrb[0].mxu0 %v274
  %v403 = vpop.f32.mrb[0].mxu0
  %v404 = vadd.f32 %v305, %v403
  %v405 = vpop.f32.mrb[0].mxu0
  %406 = vmatprep.mubr.f32.mxu0 0.0
  %407 = vmatmul.mubr.f32.gmra.mrb[0].mxu0 %v275
  %v408 = vpop.f32.mrb[0].mxu0
  %v409 = vadd.f32 %v305, %v408
  %v410 = vpop.f32.mrb[0].mxu0
  %411 = vmatprep.mubr.f32.mxu0 0.0
  %412 = vmatmul.mubr.f32.gmra.mrb[0].mxu0 %v276
  %v413 = vpop.f32.mrb[0].mxu0
  %v414 = vadd.f32 %v305, %v413
  %v415 = vpop.f32.mrb[0].mxu0
  %416 = vmatprep.mubr.f32.mxu0 0.0
  %417 = vmatmul.mubr.f32.gmra.mrb[0].mxu0 %v277
  %v418 = vpop.f32.mrb[0].mxu0
  %v419 = vadd.f32 %v305, %v418
  %v420 = vpop.f32.mrb[0].mxu0
  %421 = vmatprep.mubr.f32.mxu0 0.0
  %422 = vmatmul.mubr.f32.gmra.mrb[0].mxu0 %v278
  %v423 = vpop.f32.mrb[0].mxu0
  %v424 = vadd.f32 %v305, %v423
  %v425 = vpop.f32.mrb[0].mxu0
  %426 = vmatprep.mubr.f32.mxu0 0.0
  %427 = vmatmul.mubr.f32.gmra.mrb[0].mxu0 %v279
  %v428 = vpop.f32.mrb[0].mxu0
  %v429 = vadd.f32 %v305, %v428
  %v430 = vpop.f32.mrb[0].mxu0
  %431 = vmatprep.mubr.f32.mxu0 0.0
  %432 = vmatmul.mubr.f32.gmra.mrb[0].mxu0 %v280
  %v433 = vpop.f32.mrb[0].mxu0
  %v434 = vadd.f32 %v305, %v433
  %v435 = vpop.f32.mrb[0].mxu0
  %436 = vmatprep.mubr.f32.mxu0 0.0
  %437 = vmatmul.mubr.f32.gmra.mrb[0].mxu0 %v281
  %v438 = vpop.f32.mrb[0].mxu0
  %v439 = vadd.f32 %v305, %v438
  %v440 = vpop.f32.mrb[0].mxu0
  %441 = vmatprep.mubr.f32.mxu0 0.0
  %442 = vmatmul.mubr.f32.gmra.mrb[0].mxu0 %v282
  %v443 = vpop.f32.mrb[0].mxu0
  %v444 = vadd.f32 %v305, %v443
  %v445 = vpop.f32.mrb[0].mxu0
  %446 = vmatprep.mubr.f32.mxu0 0.0
  %447 = vmatmul.mubr.f32.gmra.mrb[0].mxu0 %v283
  %v448 = vpop.f32.mrb[0].mxu0
  %v449 = vadd.f32 %v305, %v448
  %v450 = vpop.f32.mrb[0].mxu0
  %451 = vdwg.mxu0
  %452 = vst [vmem:[%s5] sm:$0xff] %v374
  %453 = vst [vmem:[%s5 + $0x8] sm:$0xff] %v379
  %454 = vst [vmem:[%s5 + $0x10] sm:$0xff] %v384
  %455 = vst [vmem:[%s5 + $0x18] sm:$0xff] %v389
  %456 = vst [vmem:[%s5 + $0x20] sm:$0xff] %v394
  %457 = vst [vmem:[%s5 + $0x28] sm:$0xff] %v399
  %458 = vst [vmem:[%s5 + $0x30] sm:$0xff] %v404
  %459 = vst [vmem:[%s5 + $0x38] sm:$0xff] %v409
  %460 = vst [vmem:[%s5 + $0x40] sm:$0xff] %v414
  %461 = vst [vmem:[%s5 + $0x48] sm:$0xff] %v419
  %462 = vst [vmem:[%s5 + $0x50] sm:$0xff] %v424
  %463 = vst [vmem:[%s5 + $0x58] sm:$0xff] %v429
  %464 = vst [vmem:[%s5 + $0x60] sm:$0xff] %v434
  %465 = vst [vmem:[%s5 + $0x68] sm:$0xff] %v439
  %466 = vst [vmem:[%s5 + $0x70] sm:$0xff] %v444
  %467 = vst [vmem:[%s5 + $0x78] sm:$0xff] %v449
  // Predicated region
  $region22: #{mlp_forward.1} parent=0 // pred_check
    _
  $region23: #{mlp_forward.1} parent=0 // pred_check_branch
    %469 = sbr.rel (0) target = $region25
  $region24: #{mlp_forward.1} parent=0 // pred_region
    _
  $region25: #{mlp_forward.1} parent=0 // pred_fallthru
    _
  // Predicated region
  $region26: #{mlp_forward.1} parent=0 // pred_check
    _
  $region27: #{mlp_forward.1} parent=0 // pred_check_branch
    %471 = sbr.rel (0) target = $region29
  $region28: #{mlp_forward.1} parent=0 // pred_region
    _
  $region29: #{mlp_forward.1} parent=0 // pred_fallthru
    _

</llo_original>
